<compile_context>
chip_gen: v7x
topology: tpu7x:2x2x1
jax: 0.10.0
libtpu: 0.0.40
codegen_flags: <defaults>
</compile_context>

<pallas_src>
import math

import jax
import jax.numpy as jnp
import numpy as np
from jax.experimental import pallas as pl
from jax.experimental.pallas import tpu as pltpu


def _discriminator_kernel(bias_ref, wt_ref, c1_ref, c2_ref,
                          h1_ref, h2_ref, h3_ref, h4_ref, out_ref):
    """One (batch-tile, seq-tile) step of the shared bilinear scorer."""
    bias = bias_ref[0]
    wt = wt_ref[...]                                   # (H, H) == W[0].T

    # v[b, i] = sum_j W[i, j] * c[b, j]  ->  c @ W^T, f32 accumulation (MXU).
    v1 = jnp.dot(c1_ref[...], wt,
                 precision=jax.lax.Precision.HIGHEST,
                 preferred_element_type=jnp.float32)   # (tb, H)
    v2 = jnp.dot(c2_ref[...], wt,
                 precision=jax.lax.Precision.HIGHEST,
                 preferred_element_type=jnp.float32)   # (tb, H)

    def score(h_ref, v):
        # H stays on lanes for both operands -> cheap sublane broadcast of v;
        # VPU multiply + XLU lane-reduce, accumulated in float32.
        h = h_ref[...].astype(jnp.float32)             # (tb, tn, H)
        return jnp.sum(h * v[:, None, :], axis=-1) + bias   # (tb, tn)

    od = out_ref.dtype
    out_ref[:, 0, :] = score(h2_ref, v1).astype(od)    # sc_1 = f_k(h2, c1)
    out_ref[:, 1, :] = score(h1_ref, v2).astype(od)    # sc_2 = f_k(h1, c2)
    out_ref[:, 2, :] = score(h4_ref, v1).astype(od)    # sc_3 = f_k(h4, c2->c1? no, c1)
    out_ref[:, 3, :] = score(h3_ref, v2).astype(od)    # sc_4 = f_k(h3, c2)


def _pick_tiles(B, N, H, itemsize, h_pipeline_budget=8 << 20):
    """Choose (tb, tn) so 4 double-buffered h tiles fit the VMEM budget.

    tn must be a multiple of 128 (it is the lane axis of the output block)
    or equal to N; tb must be a multiple of 8 or equal to B.
    """
    per_bn = 4 * 2 * H * itemsize        # bytes per (b, n) element across the
                                         # 4 pipelined, double-buffered h inputs

    def fits(tb, tn):
        return tb * tn * per_bn <= h_pipeline_budget

    tb_cands = [t for t in (64, 32, 16, 8) if B % t == 0] or [B]
    for tb in tb_cands:
        if fits(tb, N):
            return tb, N                 # whole sequence in one block
        tn = min(N, (h_pipeline_budget // (tb * per_bn)) // 128 * 128)
        while tn >= 128:
            if N % tn == 0:
                return tb, tn
            tn -= 128
    # Nothing aligned fits (only reachable for pathological H): smallest batch
    # tile with the smallest legal lane-aligned sequence tile.
    tb = tb_cands[-1]
    if N % 128 == 0:
        return tb, 128
    return tb, N


def init_discriminator_params(key, n_h, dtype=jnp.float32):
    """Mirror torch init: xavier_uniform_ on Bilinear weight (1, n_h, n_h), bias=0."""
    fan_in, fan_out = n_h * n_h, 1 * n_h
    bound = math.sqrt(6.0 / (fan_in + fan_out))
    W = jax.random.uniform(key, (1, n_h, n_h), dtype=dtype,
                           minval=-bound, maxval=bound)
    b = jnp.zeros((1,), dtype=dtype)
    return W, b


def discriminator_forward(params, c1, c2, h1, h2, h3, h4,
                          s_bias1=None, s_bias2=None):
    """Pallas implementation of Discriminator.forward."""
    # TODO(synk): s_bias1 / s_bias2 are accepted but unused, matching the
    # reference forward(), which never reads them.
    W, bias = params                      # W: (1, H, H), bias: (1,)
    B, N, H = h1.shape
    wt = jnp.transpose(W[0])              # pre-transpose once in the wrapper
    bias = jnp.asarray(bias, jnp.float32).reshape((1,))

    out_dtype = jnp.result_type(h1.dtype, W.dtype)
    itemsize = jnp.dtype(h1.dtype).itemsize
    tb, tn = _pick_tiles(B, N, H, itemsize)
    grid = (B // tb, N // tn)

    h_spec = pl.BlockSpec((tb, tn, H), lambda bi, ni: (bi, ni, 0))
    c_spec = pl.BlockSpec((tb, H), lambda bi, ni: (bi, 0))

    cost = pl.CostEstimate(
        flops=int(2 * 4 * B * N * H + 4 * B * H * H * (N // tn)),
        transcendentals=0,
        bytes_accessed=int((4 * B * N * H + 2 * B * H + H * H) * itemsize
                           + 4 * B * N * jnp.dtype(out_dtype).itemsize),
    )

    out = pl.pallas_call(
        _discriminator_kernel,
        out_shape=jax.ShapeDtypeStruct((B, 4, N), out_dtype),
        grid=grid,
        in_specs=[
            pl.BlockSpec(memory_space=pltpu.MemorySpace.SMEM),   # bias scalar
            pl.BlockSpec((H, H), lambda bi, ni: (0, 0)),         # W^T, resident
            c_spec, c_spec,                                      # c1, c2
            h_spec, h_spec, h_spec, h_spec,                      # h1..h4
        ],
        out_specs=pl.BlockSpec((tb, 4, tn), lambda bi, ni: (bi, 0, ni)),
        compiler_params=pltpu.CompilerParams(
            dimension_semantics=("parallel", "parallel")),
        cost_estimate=cost,
    )(bias, wt, c1, c2, h1, h2, h3, h4)

    # (B, 4, N) row-major reshape == torch.cat((sc_1, sc_2, sc_3, sc_4), dim=1)
    return out.reshape(B, 4 * N)


def _discriminator_ref(params, c1, c2, h1, h2, h3, h4):
    """Pure-JAX reference matching the PyTorch forward exactly."""
    W, bias = params
    w = W[0]
    v1 = jnp.einsum('bj,ij->bi', c1, w, precision='highest')
    v2 = jnp.einsum('bj,ij->bi', c2, w, precision='highest')

    def sc(h, v):
        return jnp.einsum('bnh,bh->bn', h, v, precision='highest') + bias[0]

    return jnp.concatenate([sc(h2, v1), sc(h1, v2), sc(h4, v1), sc(h3, v2)],
                           axis=1)


def _run_case(key, B, N, H):
    kw, kc1, kc2, k1, k2, k3, k4 = jax.random.split(key, 7)
    params = init_discriminator_params(kw, H)
    c1 = jax.random.normal(kc1, (B, H), dtype=jnp.float32)
    c2 = jax.random.normal(kc2, (B, H), dtype=jnp.float32)
    h1 = jax.random.normal(k1, (B, N, H), dtype=jnp.float32)
    h2 = jax.random.normal(k2, (B, N, H), dtype=jnp.float32)
    h3 = jax.random.normal(k3, (B, N, H), dtype=jnp.float32)
    h4 = jax.random.normal(k4, (B, N, H), dtype=jnp.float32)

    logits = jax.block_until_ready(
        discriminator_forward(params, c1, c2, h1, h2, h3, h4))
    ref = _discriminator_ref(params, c1, c2, h1, h2, h3, h4)

    assert logits.shape == (B, 4 * N)
    np.testing.assert_allclose(np.asarray(logits), np.asarray(ref),
                               rtol=2e-5, atol=2e-5)


if __name__ == "__main__":
    # Small shapes consistent with the module: batch=2, seq=8, hidden=32.
    _run_case(jax.random.PRNGKey(0), B=2, N=8, H=32)
    # Moderate shape that exercises the tiled (grid > 1) path.
    _run_case(jax.random.PRNGKey(0), B=16, N=1024, H=64)
    print("KERNEL_OK")
</pallas_src>

<mosaic_0001>
module attributes {stable_mosaic.version = 11 : i64} {
  func.func @_discriminator_kernel(%arg0: i32, %arg1: i32, %arg2: memref<1xf32, #tpu.memory_space<smem>>, %arg3: memref<32x32xf32, #tpu.memory_space<vmem>>, %arg4: memref<2x32xf32, #tpu.memory_space<vmem>>, %arg5: memref<2x32xf32, #tpu.memory_space<vmem>>, %arg6: memref<2x8x32xf32, #tpu.memory_space<vmem>>, %arg7: memref<2x8x32xf32, #tpu.memory_space<vmem>>, %arg8: memref<2x8x32xf32, #tpu.memory_space<vmem>>, %arg9: memref<2x8x32xf32, #tpu.memory_space<vmem>>, %arg10: memref<2x4x8xf32, #tpu.memory_space<vmem>>) attributes {dimension_semantics = [#tpu.dimension_semantics<parallel>, #tpu.dimension_semantics<parallel>], iteration_bounds = array<i64: 1, 1>, scalar_prefetch = 0 : i64, scratch_operands = 0 : i64, tpu.core_type = #tpu.core_type<tc>, window_params = [{transform_indices = @transform_0, window_bounds = array<i64: 1>}, {pipeline_mode = #tpu.pipeline_mode<synchronous>, transform_indices = @transform_1, window_bounds = array<i64: 32, 32>}, {transform_indices = @transform_2, window_bounds = array<i64: 2, 32>}, {transform_indices = @transform_3, window_bounds = array<i64: 2, 32>}, {transform_indices = @transform_4, window_bounds = array<i64: 2, 8, 32>}, {transform_indices = @transform_5, window_bounds = array<i64: 2, 8, 32>}, {transform_indices = @transform_6, window_bounds = array<i64: 2, 8, 32>}, {transform_indices = @transform_7, window_bounds = array<i64: 2, 8, 32>}, {transform_indices = @transform_8, window_bounds = array<i64: 2, 4, 8>}]} {
    %c0 = arith.constant 0 : index
    %0 = memref.load %arg2[%c0] : memref<1xf32, #tpu.memory_space<smem>>
    %c0_0 = arith.constant 0 : index
    %c0_1 = arith.constant 0 : index
    %1 = vector.load %arg3[%c0_0, %c0_1] : memref<32x32xf32, #tpu.memory_space<vmem>>, vector<32x32xf32>
    %c0_2 = arith.constant 0 : index
    %c0_3 = arith.constant 0 : index
    %2 = vector.load %arg4[%c0_2, %c0_3] : memref<2x32xf32, #tpu.memory_space<vmem>>, vector<2x32xf32>
    %cst = arith.constant dense<0.000000e+00> : vector<2x32xf32>
    %3 = tpu.matmul %2, %1, %cst {dimension_numbers = #tpu.dot_dimension_numbers<[1], [0], [0], [1], [0, 0, 1, 1], [], []>, precision = #tpu.contract_precision<fp32>} : vector<2x32xf32>, vector<32x32xf32>, vector<2x32xf32> -> vector<2x32xf32>
    %c0_4 = arith.constant 0 : index
    %c0_5 = arith.constant 0 : index
    %4 = vector.load %arg5[%c0_4, %c0_5] : memref<2x32xf32, #tpu.memory_space<vmem>>, vector<2x32xf32>
    %cst_6 = arith.constant dense<0.000000e+00> : vector<2x32xf32>
    %5 = tpu.matmul %4, %1, %cst_6 {dimension_numbers = #tpu.dot_dimension_numbers<[1], [0], [0], [1], [0, 0, 1, 1], [], []>, precision = #tpu.contract_precision<fp32>} : vector<2x32xf32>, vector<32x32xf32>, vector<2x32xf32> -> vector<2x32xf32>
    %c0_7 = arith.constant 0 : index
    %c0_8 = arith.constant 0 : index
    %c0_9 = arith.constant 0 : index
    %6 = vector.load %arg7[%c0_7, %c0_8, %c0_9] : memref<2x8x32xf32, #tpu.memory_space<vmem>>, vector<2x8x32xf32>
    %7 = vector.shape_cast %3 : vector<2x32xf32> to vector<2x1x32xf32>
    %8 = vector.broadcast %7 : vector<2x1x32xf32> to vector<2x8x32xf32>
    %9 = arith.mulf %6, %8 : vector<2x8x32xf32>
    %cst_10 = arith.constant dense<0.000000e+00> : vector<2x8xf32>
    %10 = vector.multi_reduction <add>, %9, %cst_10 [2] : vector<2x8x32xf32> to vector<2x8xf32>
    %11 = vector.broadcast %0 : f32 to vector<2x8xf32>
    %12 = arith.addf %10, %11 : vector<2x8xf32>
    %c0_11 = arith.constant 0 : index
    %c0_12 = arith.constant 0 : index
    %c0_13 = arith.constant 0 : index
    %13 = vector.load %arg10[%c0_11, %c0_12, %c0_13] : memref<2x4x8xf32, #tpu.memory_space<vmem>>, vector<2x1x8xf32>
    %14 = vector.shape_cast %13 : vector<2x1x8xf32> to vector<2x8xf32>
    %15 = vector.shape_cast %12 : vector<2x8xf32> to vector<2x1x8xf32>
    tpu.vector_store %arg10[%c0_11, %c0_12, %c0_13], %15 {strides = array<i32>} : memref<2x4x8xf32, #tpu.memory_space<vmem>>, vector<2x1x8xf32>,
    %c0_14 = arith.constant 0 : index
    %c0_15 = arith.constant 0 : index
    %c0_16 = arith.constant 0 : index
    %16 = vector.load %arg6[%c0_14, %c0_15, %c0_16] : memref<2x8x32xf32, #tpu.memory_space<vmem>>, vector<2x8x32xf32>
    %17 = vector.shape_cast %5 : vector<2x32xf32> to vector<2x1x32xf32>
    %18 = vector.broadcast %17 : vector<2x1x32xf32> to vector<2x8x32xf32>
    %19 = arith.mulf %16, %18 : vector<2x8x32xf32>
    %cst_17 = arith.constant dense<0.000000e+00> : vector<2x8xf32>
    %20 = vector.multi_reduction <add>, %19, %cst_17 [2] : vector<2x8x32xf32> to vector<2x8xf32>
    %21 = vector.broadcast %0 : f32 to vector<2x8xf32>
    %22 = arith.addf %20, %21 : vector<2x8xf32>
    %c0_18 = arith.constant 0 : index
    %c1 = arith.constant 1 : index
    %c0_19 = arith.constant 0 : index
    %23 = vector.load %arg10[%c0_18, %c1, %c0_19] : memref<2x4x8xf32, #tpu.memory_space<vmem>>, vector<2x1x8xf32>
    %24 = vector.shape_cast %23 : vector<2x1x8xf32> to vector<2x8xf32>
    %25 = vector.shape_cast %22 : vector<2x8xf32> to vector<2x1x8xf32>
    tpu.vector_store %arg10[%c0_18, %c1, %c0_19], %25 {strides = array<i32>} : memref<2x4x8xf32, #tpu.memory_space<vmem>>, vector<2x1x8xf32>,
    %c0_20 = arith.constant 0 : index
    %c0_21 = arith.constant 0 : index
    %c0_22 = arith.constant 0 : index
    %26 = vector.load %arg9[%c0_20, %c0_21, %c0_22] : memref<2x8x32xf32, #tpu.memory_space<vmem>>, vector<2x8x32xf32>
    %27 = vector.shape_cast %3 : vector<2x32xf32> to vector<2x1x32xf32>
    %28 = vector.broadcast %27 : vector<2x1x32xf32> to vector<2x8x32xf32>
    %29 = arith.mulf %26, %28 : vector<2x8x32xf32>
    %cst_23 = arith.constant dense<0.000000e+00> : vector<2x8xf32>
    %30 = vector.multi_reduction <add>, %29, %cst_23 [2] : vector<2x8x32xf32> to vector<2x8xf32>
    %31 = vector.broadcast %0 : f32 to vector<2x8xf32>
    %32 = arith.addf %30, %31 : vector<2x8xf32>
    %c0_24 = arith.constant 0 : index
    %c2 = arith.constant 2 : index
    %c0_25 = arith.constant 0 : index
    %33 = vector.load %arg10[%c0_24, %c2, %c0_25] : memref<2x4x8xf32, #tpu.memory_space<vmem>>, vector<2x1x8xf32>
    %34 = vector.shape_cast %33 : vector<2x1x8xf32> to vector<2x8xf32>
    %35 = vector.shape_cast %32 : vector<2x8xf32> to vector<2x1x8xf32>
    tpu.vector_store %arg10[%c0_24, %c2, %c0_25], %35 {strides = array<i32>} : memref<2x4x8xf32, #tpu.memory_space<vmem>>, vector<2x1x8xf32>,
    %c0_26 = arith.constant 0 : index
    %c0_27 = arith.constant 0 : index
    %c0_28 = arith.constant 0 : index
    %36 = vector.load %arg8[%c0_26, %c0_27, %c0_28] : memref<2x8x32xf32, #tpu.memory_space<vmem>>, vector<2x8x32xf32>
    %37 = vector.shape_cast %5 : vector<2x32xf32> to vector<2x1x32xf32>
    %38 = vector.broadcast %37 : vector<2x1x32xf32> to vector<2x8x32xf32>
    %39 = arith.mulf %36, %38 : vector<2x8x32xf32>
    %cst_29 = arith.constant dense<0.000000e+00> : vector<2x8xf32>
    %40 = vector.multi_reduction <add>, %39, %cst_29 [2] : vector<2x8x32xf32> to vector<2x8xf32>
    %41 = vector.broadcast %0 : f32 to vector<2x8xf32>
    %42 = arith.addf %40, %41 : vector<2x8xf32>
    %c0_30 = arith.constant 0 : index
    %c3 = arith.constant 3 : index
    %c0_31 = arith.constant 0 : index
    %43 = vector.load %arg10[%c0_30, %c3, %c0_31] : memref<2x4x8xf32, #tpu.memory_space<vmem>>, vector<2x1x8xf32>
    %44 = vector.shape_cast %43 : vector<2x1x8xf32> to vector<2x8xf32>
    %45 = vector.shape_cast %42 : vector<2x8xf32> to vector<2x1x8xf32>
    tpu.vector_store %arg10[%c0_30, %c3, %c0_31], %45 {strides = array<i32>} : memref<2x4x8xf32, #tpu.memory_space<vmem>>, vector<2x1x8xf32>,
    return
  }
  func.func @transform_0(%arg0: i32, %arg1: i32) -> i32 {
    %c0_i32 = arith.constant 0 : i32
    %c0_i32_0 = arith.constant 0 : i32
    return %c0_i32 : i32
  }
  func.func @transform_1(%arg0: i32, %arg1: i32) -> (i32, i32) {
    %c0_i32 = arith.constant 0 : i32
    %c0_i32_0 = arith.constant 0 : i32
    %c0_i32_1 = arith.constant 0 : i32
    return %c0_i32, %c0_i32_0 : i32, i32
  }
  func.func @transform_2(%arg0: i32, %arg1: i32) -> (i32, i32) {
    %c0_i32 = arith.constant 0 : i32
    %c0_i32_0 = arith.constant 0 : i32
    return %arg0, %c0_i32 : i32, i32
  }
  func.func @transform_3(%arg0: i32, %arg1: i32) -> (i32, i32) {
    %c0_i32 = arith.constant 0 : i32
    %c0_i32_0 = arith.constant 0 : i32
    return %arg0, %c0_i32 : i32, i32
  }
  func.func @transform_4(%arg0: i32, %arg1: i32) -> (i32, i32, i32) {
    %c0_i32 = arith.constant 0 : i32
    %c0_i32_0 = arith.constant 0 : i32
    return %arg0, %arg1, %c0_i32 : i32, i32, i32
  }
  func.func @transform_5(%arg0: i32, %arg1: i32) -> (i32, i32, i32) {
    %c0_i32 = arith.constant 0 : i32
    %c0_i32_0 = arith.constant 0 : i32
    return %arg0, %arg1, %c0_i32 : i32, i32, i32
  }
  func.func @transform_6(%arg0: i32, %arg1: i32) -> (i32, i32, i32) {
    %c0_i32 = arith.constant 0 : i32
    %c0_i32_0 = arith.constant 0 : i32
    return %arg0, %arg1, %c0_i32 : i32, i32, i32
  }
  func.func @transform_7(%arg0: i32, %arg1: i32) -> (i32, i32, i32) {
    %c0_i32 = arith.constant 0 : i32
    %c0_i32_0 = arith.constant 0 : i32
    return %arg0, %arg1, %c0_i32 : i32, i32, i32
  }
  func.func @transform_8(%arg0: i32, %arg1: i32) -> (i32, i32, i32) {
    %c0_i32 = arith.constant 0 : i32
    %c0_i32_0 = arith.constant 0 : i32
    return %arg0, %c0_i32, %arg1 : i32, i32, i32
  }
}

</mosaic_0001>

<llo_original>
// kernel: tpu_custom_call.1
$region0: #{tpu_custom_call.1}
  #allocation0 [shape = 'u32[]', space=smem, size = 0x4, offset = 0x4, fixed_abs, tag = 'smem constant byte address 0x4 - core index']
  #allocation1 [shape = 'u32[144,128]{1,0:T(1,128)}', space=vmem, size = 0x12000, scoped, tag = 'internal scratch']
  #allocation2 [shape = 'f32[1]{0:T(128)S(6)}', space=smem, size = 0x200, scoped, tag = 'scoped memory for tpu_custom_call.1']
  %s0 = inlined_call_operand.<no memory space> [shape: f32[1], index: 0, kind: input, shape index: {}]
  %s1 = inlined_call_operand.hbm [shape: f32[32,32], index: 1, kind: input, shape index: {}]
  %s2 = inlined_call_operand.vmem [shape: f32[2,32], index: 2, kind: input, shape index: {}]
  %s3 = inlined_call_operand.hbm [shape: f32[2,32], index: 3, kind: input, shape index: {}]
  %s4 = inlined_call_operand.hbm [shape: f32[2,8,32], index: 4, kind: input, shape index: {}]
  %s5 = inlined_call_operand.vmem [shape: f32[2,8,32], index: 5, kind: input, shape index: {}]
  %s6 = inlined_call_operand.hbm [shape: f32[2,8,32], index: 6, kind: input, shape index: {}]
  %s7 = inlined_call_operand.hbm [shape: f32[2,8,32], index: 7, kind: input, shape index: {}]
  %s8 = inlined_call_operand.hbm [shape: f32[2,4,8], index: 8, kind: output, shape index: {}]
  %s9 = sld [smem:[#allocation0]]
  $region62: #{tpu_custom_call.1} parent=0
    _
  %s11 = ssub.s32 1, %s9
  %s12 = scalar_select 0, %s11, %s9
  %13 = sst [smem:[#allocation2]] %s0
  $region1: #{tpu_custom_call.1} parent=0
    #allocation3 [shape = 'u8[16384]{0}', space=vmem, size = 0x4000, scoped, tag = 'input window, operand 1, single buffered']
    #allocation4 [shape = 's32[1]{0}', space=sflag, size = 0x4, scoped, tag = 'scoped memory for tpu_custom_call.1']
    #allocation5 [shape = 's32[1]{0}', space=sflag, size = 0x4, scoped, tag = 'scoped memory for tpu_custom_call.1']
    #allocation6 [shape = 'u8[1024]{0}', space=vmem, size = 0x400, scoped, tag = 'input window, operand 3, single buffered']
    #allocation7 [shape = 's32[1]{0}', space=sflag, size = 0x4, scoped, tag = 'scoped memory for tpu_custom_call.1']
    #allocation8 [shape = 'u8[8192]{0}', space=vmem, size = 0x2000, scoped, tag = 'input window, operand 4, single buffered']
    #allocation9 [shape = 'u8[8192]{0}', space=vmem, size = 0x2000, scoped, tag = 'input window, operand 6, single buffered']
    #allocation10 [shape = 's32[1]{0}', space=sflag, size = 0x4, scoped, tag = 'scoped memory for tpu_custom_call.1']
    #allocation11 [shape = 'u8[8192]{0}', space=vmem, size = 0x2000, scoped, tag = 'input window, operand 7, single buffered']
    #allocation12 [shape = 'u8[4096]{0}', space=vmem, size = 0x1000, scoped, tag = 'output window, operand 0, single buffered']
    %14 = vsyncpa [#allocation4], 0
    %15 = vsyncpa [#allocation7], 0
    %16 = vsyncpa [#allocation10], 0
    %17 = vsyncpa [#allocation5], 0
    // Predicated region
    $region2: #{tpu_custom_call.1} parent=1 // pred_check
      _
    $region3: #{tpu_custom_call.1} parent=1 // pred_check_branch
      %19 = sbr.rel (0) target = $region5
    $region4: #{tpu_custom_call.1} parent=1 // pred_region
      _
    $region5: #{tpu_custom_call.1} parent=1 // pred_fallthru
      _
    // Predicated region
    $region6: #{tpu_custom_call.1} parent=1 // pred_check
      _
    $region7: #{tpu_custom_call.1} parent=1 // pred_check_branch
      %21 = sbr.rel (0) target = $region9
    $region8: #{tpu_custom_call.1} parent=1 // pred_region
      %s23 = ssub.s32 512, 512
      %24 = vsyncadd [#allocation4], %s23
      %s25 = sshll.u32 [#allocation3], 4
      %s26 = int_to_ptr.vmem [resolvable:$true] %s25
      %31 = dma.hbm_to_vmem [thread:$0]  %s1, 512, %s26, [#allocation4], 128, 128, 8
    $region9: #{tpu_custom_call.1} parent=1 // pred_fallthru
      _
    // Predicated region
    $region10: #{tpu_custom_call.1} parent=1 // pred_check
      _
    $region11: #{tpu_custom_call.1} parent=1 // pred_check_branch
      %33 = sbr.rel (0) target = $region13
    $region12: #{tpu_custom_call.1} parent=1 // pred_region
      _
    $region13: #{tpu_custom_call.1} parent=1 // pred_fallthru
      _
    // Predicated region
    $region14: #{tpu_custom_call.1} parent=1 // pred_check
      _
    $region15: #{tpu_custom_call.1} parent=1 // pred_check_branch
      %35 = sbr.rel (0) target = $region17
    $region16: #{tpu_custom_call.1} parent=1 // pred_region
      %s37 = ssub.s32 32, 32
      %38 = vsyncadd [#allocation7], %s37
      %s40 = sshll.u32 [#allocation6], 4
      %s41 = int_to_ptr.vmem [resolvable:$true] %s40
      %43 = dma.hbm_to_vmem [thread:$0]  %s3, 32, %s41, [#allocation7]
    $region17: #{tpu_custom_call.1} parent=1 // pred_fallthru
      _
    // Predicated region
    $region18: #{tpu_custom_call.1} parent=1 // pred_check
      _
    $region19: #{tpu_custom_call.1} parent=1 // pred_check_branch
      %45 = sbr.rel (0) target = $region21
    $region20: #{tpu_custom_call.1} parent=1 // pred_region
      %s47 = ssub.s32 256, 256
      %48 = vsyncadd [#allocation7], %s47
      %s49 = sshll.u32 [#allocation8], 4
      %s50 = int_to_ptr.vmem [resolvable:$true] %s49
      %55 = dma.hbm_to_vmem [thread:$0]  %s4, 256, %s50, [#allocation7], 128, 128, 8
    $region21: #{tpu_custom_call.1} parent=1 // pred_fallthru
      _
    // Predicated region
    $region22: #{tpu_custom_call.1} parent=1 // pred_check
      _
    $region23: #{tpu_custom_call.1} parent=1 // pred_check_branch
      %57 = sbr.rel (0) target = $region25
    $region24: #{tpu_custom_call.1} parent=1 // pred_region
      _
    $region25: #{tpu_custom_call.1} parent=1 // pred_fallthru
      _
    // Predicated region
    $region26: #{tpu_custom_call.1} parent=1 // pred_check
      _
    $region27: #{tpu_custom_call.1} parent=1 // pred_check_branch
      %59 = sbr.rel (0) target = $region29
    $region28: #{tpu_custom_call.1} parent=1 // pred_region
      %s61 = ssub.s32 256, 256
      %62 = vsyncadd [#allocation10], %s61
      %s63 = sshll.u32 [#allocation9], 4
      %s64 = int_to_ptr.vmem [resolvable:$true] %s63
      %69 = dma.hbm_to_vmem [thread:$0]  %s6, 256, %s64, [#allocation10], 128, 128, 8
    $region29: #{tpu_custom_call.1} parent=1 // pred_fallthru
      _
    // Predicated region
    $region30: #{tpu_custom_call.1} parent=1 // pred_check
      _
    $region31: #{tpu_custom_call.1} parent=1 // pred_check_branch
      %71 = sbr.rel (0) target = $region33
    $region32: #{tpu_custom_call.1} parent=1 // pred_region
      %s73 = ssub.s32 256, 256
      %74 = vsyncadd [#allocation10], %s73
      %s75 = sshll.u32 [#allocation11], 4
      %s76 = int_to_ptr.vmem [resolvable:$true] %s75
      %81 = dma.hbm_to_vmem [thread:$0]  %s7, 256, %s76, [#allocation10], 128, 128, 8
    $region33: #{tpu_custom_call.1} parent=1 // pred_fallthru
      _
    // Predicated region
    $region34: #{tpu_custom_call.1} parent=1 // pred_check
      _
    $region35: #{tpu_custom_call.1} parent=1 // pred_check_branch
      %83 = sbr.rel (0) target = $region37
    $region36: #{tpu_custom_call.1} parent=1 // pred_region
      %84 = dma.done [#allocation4], 512
    $region37: #{tpu_custom_call.1} parent=1 // pred_fallthru
      _
    // Predicated region
    $region38: #{tpu_custom_call.1} parent=1 // pred_check
      _
    $region39: #{tpu_custom_call.1} parent=1 // pred_check_branch
      %86 = sbr.rel (0) target = $region41
    $region40: #{tpu_custom_call.1} parent=1 // pred_region
      %87 = dma.done [#allocation7], 32
    $region41: #{tpu_custom_call.1} parent=1 // pred_fallthru
      _
    // Predicated region
    $region42: #{tpu_custom_call.1} parent=1 // pred_check
      _
    $region43: #{tpu_custom_call.1} parent=1 // pred_check_branch
      %89 = sbr.rel (0) target = $region45
    $region44: #{tpu_custom_call.1} parent=1 // pred_region
      %90 = dma.done [#allocation7], 256
    $region45: #{tpu_custom_call.1} parent=1 // pred_fallthru
      _
    // Predicated region
    $region46: #{tpu_custom_call.1} parent=1 // pred_check
      _
    $region47: #{tpu_custom_call.1} parent=1 // pred_check_branch
      %92 = sbr.rel (0) target = $region49
    $region48: #{tpu_custom_call.1} parent=1 // pred_region
      %93 = dma.done [#allocation10], 256
    $region49: #{tpu_custom_call.1} parent=1 // pred_fallthru
      _
    // Predicated region
    $region50: #{tpu_custom_call.1} parent=1 // pred_check
      _
    $region51: #{tpu_custom_call.1} parent=1 // pred_check_branch
      %95 = sbr.rel (0) target = $region53
    $region52: #{tpu_custom_call.1} parent=1 // pred_region
      %96 = dma.done [#allocation10], 256
    $region53: #{tpu_custom_call.1} parent=1 // pred_fallthru
      _
    %s97 = sld [smem:[#allocation2]]
    %v98 = vld [vmem:[#allocation3] sm:$0xff]
    %v99 = vld [vmem:[#allocation3 + $0x8] sm:$0xff]
    %v100 = vld [vmem:[#allocation3 + $0x10] sm:$0xff]
    %v101 = vld [vmem:[#allocation3 + $0x18] sm:$0xff]
    %v102 = vld [vmem:[%s2] sm:$0x3]
    %vm103 = vcmask 261120
    %v105 = vsel %vm103, %v102, 0
    %107 = vmatprep.subr.mxu0 0.0
    %v108 = vand.u32 %v98, 4294901760
    %109 = vmatpush1.msra.mxu0 %v108
    %110 = vmatprep.subr.mxu0 0.0
    %v111 = vand.u32 %v99, 4294901760
    %112 = vmatpush1.msra.mxu0 %v111
    %113 = vmatprep.subr.mxu0 0.0
    %v114 = vand.u32 %v100, 4294901760
    %115 = vmatpush1.msra.mxu0 %v114
    %116 = vmatprep.subr.mxu0 0.0
    %v117 = vand.u32 %v101, 4294901760
    %118 = vmatpush1.msra.mxu0 %v117
    %119 = vmatprep.subr.mxu0 0.0
    %120 = vmatpush1.msra.mxu0 0.0
    %121 = vmatprep.subr.mxu0 0.0
    %122 = vmatpush1.msra.mxu0 0.0
    %123 = vmatprep.subr.mxu0 0.0
    %124 = vmatpush1.msra.mxu0 0.0
    %125 = vmatprep.subr.mxu0 0.0
    %126 = vmatpush1.msra.mxu0 0.0
    %127 = vmatprep.subr.mxu0 0.0
    %128 = vmatpush1.msra.mxu0 0.0
    %129 = vmatprep.subr.mxu0 0.0
    %130 = vmatpush1.msra.mxu0 0.0
    %131 = vmatprep.subr.mxu0 0.0
    %132 = vmatpush1.msra.mxu0 0.0
    %133 = vmatprep.subr.mxu0 0.0
    %134 = vmatpush1.msra.mxu0 0.0
    %135 = vmatprep.subr.mxu0 0.0
    %136 = vmatpush1.msra.mxu0 0.0
    %137 = vmatprep.subr.mxu0 0.0
    %138 = vmatpush1.msra.mxu0 0.0
    %139 = vmatprep.subr.mxu0 0.0
    %140 = vmatpush1.msra.mxu0 0.0
    %141 = vmatprep.subr.mxu0 0.0
    %142 = vmatpush1.msra.mxu0 0.0
    %143 = vmatprep.subr.mxu0 0.0
    %144 = vmatpush1.msra.mxu0 0.0
    %145 = vmatprep.subr.mxu0 0.0
    %146 = vmatpush1.msra.mxu0 0.0
    %147 = vmatprep.subr.mxu0 0.0
    %148 = vmatpush1.msra.mxu0 0.0
    %149 = vmatprep.subr.mxu0 0.0
    %150 = vmatpush1.msra.mxu0 0.0
    %151 = vmatprep.subr.mxu0 0.0
    %152 = vmatpush1.msra.mxu0 0.0
    %153 = vmatprep.subr.mxu0 0.0
    %154 = vmatpush1.msra.mxu0 0.0
    %155 = vmatprep.subr.mxu0 0.0
    %156 = vmatpush1.msra.mxu0 0.0
    %157 = vmatprep.subr.mxu0 0.0
    %158 = vmatpush1.msra.mxu0 0.0
    %159 = vmatprep.subr.mxu0 0.0
    %160 = vmatpush1.msra.mxu0 0.0
    %161 = vmatprep.subr.mxu0 0.0
    %162 = vmatpush1.msra.mxu0 0.0
    %163 = vmatprep.subr.mxu0 0.0
    %164 = vmatpush1.msra.mxu0 0.0
    %165 = vmatprep.subr.mxu0 0.0
    %166 = vmatpush1.msra.mxu0 0.0
    %167 = vmatprep.subr.mxu0 0.0
    %168 = vmatpush1.msra.mxu0 0.0
    %169 = vmatprep.subr.mxu0 0.0
    %170 = vmatpush1.msra.mxu0 0.0
    %171 = vmatprep.subr.mxu0 0.0
    %172 = vmatpush1.msra.mxu0 0.0
    %173 = vmatprep.subr.mxu0 0.0
    %174 = vmatpush1.msra.mxu0 0.0
    %175 = vmatprep.mubr.f32.mxu0 0.0
    %v176 = vand.u32 %v105, 4294901760
    %v177 = vsub.f32 %v105, %v176
    %v178 = vand.u32 %v177, 4294901760
    %v179 = vsub.f32 %v177, %v178
    %v180 = vand.u32 %v179, 4294901760
    %181 = vmatmul.mubr.f32.gmra.mrb[0].mxu0 %v180
    %v182 = vpop.f32.mrb[0].mxu0
    %v183 = vadd.f32 0.0, %v182
    %v184 = vpop.f32.mrb[0].mxu0
    %185 = vdwg.mxu0
    %186 = vmatprep.subr.mxu0 0.0
    %v187 = vand.u32 %v98, 4294901760
    %v188 = vsub.f32 %v98, %v187
    %v189 = vand.u32 %v188, 4294901760
    %v190 = vsub.f32 %v188, %v189
    %v191 = vand.u32 %v190, 4294901760
    %192 = vmatpush1.msra.mxu0 %v191
    %193 = vmatprep.subr.mxu0 0.0
    %v194 = vand.u32 %v99, 4294901760
    %v195 = vsub.f32 %v99, %v194
    %v196 = vand.u32 %v195, 4294901760
    %v197 = vsub.f32 %v195, %v196
    %v198 = vand.u32 %v197, 4294901760
    %199 = vmatpush1.msra.mxu0 %v198
    %200 = vmatprep.subr.mxu0 0.0
    %v201 = vand.u32 %v100, 4294901760
    %v202 = vsub.f32 %v100, %v201
    %v203 = vand.u32 %v202, 4294901760
    %v204 = vsub.f32 %v202, %v203
    %v205 = vand.u32 %v204, 4294901760
    %206 = vmatpush1.msra.mxu0 %v205
    %207 = vmatprep.subr.mxu0 0.0
    %v208 = vand.u32 %v101, 4294901760
    %v209 = vsub.f32 %v101, %v208
    %v210 = vand.u32 %v209, 4294901760
    %v211 = vsub.f32 %v209, %v210
    %v212 = vand.u32 %v211, 4294901760
    %213 = vmatpush1.msra.mxu0 %v212
    %214 = vmatprep.subr.mxu0 0.0
    %215 = vmatpush1.msra.mxu0 0.0
    %216 = vmatprep.subr.mxu0 0.0
    %217 = vmatpush1.msra.mxu0 0.0
    %218 = vmatprep.subr.mxu0 0.0
    %219 = vmatpush1.msra.mxu0 0.0
    %220 = vmatprep.subr.mxu0 0.0
    %221 = vmatpush1.msra.mxu0 0.0
    %222 = vmatprep.subr.mxu0 0.0
    %223 = vmatpush1.msra.mxu0 0.0
    %224 = vmatprep.subr.mxu0 0.0
    %225 = vmatpush1.msra.mxu0 0.0
    %226 = vmatprep.subr.mxu0 0.0
    %227 = vmatpush1.msra.mxu0 0.0
    %228 = vmatprep.subr.mxu0 0.0
    %229 = vmatpush1.msra.mxu0 0.0
    %230 = vmatprep.subr.mxu0 0.0
    %231 = vmatpush1.msra.mxu0 0.0
    %232 = vmatprep.subr.mxu0 0.0
    %233 = vmatpush1.msra.mxu0 0.0
    %234 = vmatprep.subr.mxu0 0.0
    %235 = vmatpush1.msra.mxu0 0.0
    %236 = vmatprep.subr.mxu0 0.0
    %237 = vmatpush1.msra.mxu0 0.0
    %238 = vmatprep.subr.mxu0 0.0
    %239 = vmatpush1.msra.mxu0 0.0
    %240 = vmatprep.subr.mxu0 0.0
    %241 = vmatpush1.msra.mxu0 0.0
    %242 = vmatprep.subr.mxu0 0.0
    %243 = vmatpush1.msra.mxu0 0.0
    %244 = vmatprep.subr.mxu0 0.0
    %245 = vmatpush1.msra.mxu0 0.0
    %246 = vmatprep.subr.mxu0 0.0
    %247 = vmatpush1.msra.mxu0 0.0
    %248 = vmatprep.subr.mxu0 0.0
    %249 = vmatpush1.msra.mxu0 0.0
    %250 = vmatprep.subr.mxu0 0.0
    %251 = vmatpush1.msra.mxu0 0.0
    %252 = vmatprep.subr.mxu0 0.0
    %253 = vmatpush1.msra.mxu0 0.0
    %254 = vmatprep.subr.mxu0 0.0
    %255 = vmatpush1.msra.mxu0 0.0
    %256 = vmatprep.subr.mxu0 0.0
    %257 = vmatpush1.msra.mxu0 0.0
    %258 = vmatprep.subr.mxu0 0.0
    %259 = vmatpush1.msra.mxu0 0.0
    %260 = vmatprep.subr.mxu0 0.0
    %261 = vmatpush1.msra.mxu0 0.0
    %262 = vmatprep.subr.mxu0 0.0
    %263 = vmatpush1.msra.mxu0 0.0
    %264 = vmatprep.subr.mxu0 0.0
    %265 = vmatpush1.msra.mxu0 0.0
    %266 = vmatprep.subr.mxu0 0.0
    %267 = vmatpush1.msra.mxu0 0.0
    %268 = vmatprep.subr.mxu0 0.0
    %269 = vmatpush1.msra.mxu0 0.0
    %270 = vmatprep.mubr.f32.mxu0 0.0
    %v271 = vand.u32 %v105, 4294901760
    %272 = vmatmul.mubr.f32.gmra.mrb[0].mxu0 %v271
    %v273 = vpop.f32.mrb[0].mxu0
    %v274 = vadd.f32 %v183, %v273
    %v275 = vpop.f32.mrb[0].mxu0
    %276 = vdwg.mxu0
    %277 = vmatprep.subr.mxu0 0.0
    %v278 = vand.u32 %v98, 4294901760
    %v279 = vsub.f32 %v98, %v278
    %280 = vmatpush1.msra.mxu0 %v279
    %281 = vmatprep.subr.mxu0 0.0
    %v282 = vand.u32 %v99, 4294901760
    %v283 = vsub.f32 %v99, %v282
    %284 = vmatpush1.msra.mxu0 %v283
    %285 = vmatprep.subr.mxu0 0.0
    %v286 = vand.u32 %v100, 4294901760
    %v287 = vsub.f32 %v100, %v286
    %288 = vmatpush1.msra.mxu0 %v287
    %289 = vmatprep.subr.mxu0 0.0
    %v290 = vand.u32 %v101, 4294901760
    %v291 = vsub.f32 %v101, %v290
    %292 = vmatpush1.msra.mxu0 %v291
    %293 = vmatprep.subr.mxu0 0.0
    %294 = vmatpush1.msra.mxu0 0.0
    %295 = vmatprep.subr.mxu0 0.0
    %296 = vmatpush1.msra.mxu0 0.0
    %297 = vmatprep.subr.mxu0 0.0
    %298 = vmatpush1.msra.mxu0 0.0
    %299 = vmatprep.subr.mxu0 0.0
    %300 = vmatpush1.msra.mxu0 0.0
    %301 = vmatprep.subr.mxu0 0.0
    %302 = vmatpush1.msra.mxu0 0.0
    %303 = vmatprep.subr.mxu0 0.0
    %304 = vmatpush1.msra.mxu0 0.0
    %305 = vmatprep.subr.mxu0 0.0
    %306 = vmatpush1.msra.mxu0 0.0
    %307 = vmatprep.subr.mxu0 0.0
    %308 = vmatpush1.msra.mxu0 0.0
    %309 = vmatprep.subr.mxu0 0.0
    %310 = vmatpush1.msra.mxu0 0.0
    %311 = vmatprep.subr.mxu0 0.0
    %312 = vmatpush1.msra.mxu0 0.0
    %313 = vmatprep.subr.mxu0 0.0
    %314 = vmatpush1.msra.mxu0 0.0
    %315 = vmatprep.subr.mxu0 0.0
    %316 = vmatpush1.msra.mxu0 0.0
    %317 = vmatprep.subr.mxu0 0.0
    %318 = vmatpush1.msra.mxu0 0.0
    %319 = vmatprep.subr.mxu0 0.0
    %320 = vmatpush1.msra.mxu0 0.0
    %321 = vmatprep.subr.mxu0 0.0
    %322 = vmatpush1.msra.mxu0 0.0
    %323 = vmatprep.subr.mxu0 0.0
    %324 = vmatpush1.msra.mxu0 0.0
    %325 = vmatprep.subr.mxu0 0.0
    %326 = vmatpush1.msra.mxu0 0.0
    %327 = vmatprep.subr.mxu0 0.0
    %328 = vmatpush1.msra.mxu0 0.0
    %329 = vmatprep.subr.mxu0 0.0
    %330 = vmatpush1.msra.mxu0 0.0
    %331 = vmatprep.subr.mxu0 0.0
    %332 = vmatpush1.msra.mxu0 0.0
    %333 = vmatprep.subr.mxu0 0.0
    %334 = vmatpush1.msra.mxu0 0.0
    %335 = vmatprep.subr.mxu0 0.0
    %336 = vmatpush1.msra.mxu0 0.0
    %337 = vmatprep.subr.mxu0 0.0
    %338 = vmatpush1.msra.mxu0 0.0
    %339 = vmatprep.subr.mxu0 0.0
    %340 = vmatpush1.msra.mxu0 0.0
    %341 = vmatprep.subr.mxu0 0.0
    %342 = vmatpush1.msra.mxu0 0.0
    %343 = vmatprep.subr.mxu0 0.0
    %344 = vmatpush1.msra.mxu0 0.0
    %345 = vmatprep.subr.mxu0 0.0
    %346 = vmatpush1.msra.mxu0 0.0
    %347 = vmatprep.subr.mxu0 0.0
    %348 = vmatpush1.msra.mxu0 0.0
    %349 = vmatprep.mubr.f32.mxu0 0.0
    %v350 = vand.u32 %v105, 4294901760
    %v351 = vsub.f32 %v105, %v350
    %352 = vmatmul.mubr.f32.gmra.mrb[0].mxu0 %v351
    %v353 = vpop.f32.mrb[0].mxu0
    %v354 = vadd.f32 %v274, %v353
    %v355 = vpop.f32.mrb[0].mxu0
    %356 = vdwg.mxu0
    %357 = vmatprep.subr.mxu0 0.0
    %v358 = vand.u32 %v98, 4294901760
    %359 = vmatpush1.msra.mxu0 %v358
    %360 = vmatprep.subr.mxu0 0.0
    %v361 = vand.u32 %v99, 4294901760
    %362 = vmatpush1.msra.mxu0 %v361
    %363 = vmatprep.subr.mxu0 0.0
    %v364 = vand.u32 %v100, 4294901760
    %365 = vmatpush1.msra.mxu0 %v364
    %366 = vmatprep.subr.mxu0 0.0
    %v367 = vand.u32 %v101, 4294901760
    %368 = vmatpush1.msra.mxu0 %v367
    %369 = vmatprep.subr.mxu0 0.0
    %370 = vmatpush1.msra.mxu0 0.0
    %371 = vmatprep.subr.mxu0 0.0
    %372 = vmatpush1.msra.mxu0 0.0
    %373 = vmatprep.subr.mxu0 0.0
    %374 = vmatpush1.msra.mxu0 0.0
    %375 = vmatprep.subr.mxu0 0.0
    %376 = vmatpush1.msra.mxu0 0.0
    %377 = vmatprep.subr.mxu0 0.0
    %378 = vmatpush1.msra.mxu0 0.0
    %379 = vmatprep.subr.mxu0 0.0
    %380 = vmatpush1.msra.mxu0 0.0
    %381 = vmatprep.subr.mxu0 0.0
    %382 = vmatpush1.msra.mxu0 0.0
    %383 = vmatprep.subr.mxu0 0.0
    %384 = vmatpush1.msra.mxu0 0.0
    %385 = vmatprep.subr.mxu0 0.0
    %386 = vmatpush1.msra.mxu0 0.0
    %387 = vmatprep.subr.mxu0 0.0
    %388 = vmatpush1.msra.mxu0 0.0
    %389 = vmatprep.subr.mxu0 0.0
    %390 = vmatpush1.msra.mxu0 0.0
    %391 = vmatprep.subr.mxu0 0.0
    %392 = vmatpush1.msra.mxu0 0.0
    %393 = vmatprep.subr.mxu0 0.0
    %394 = vmatpush1.msra.mxu0 0.0
    %395 = vmatprep.subr.mxu0 0.0
    %396 = vmatpush1.msra.mxu0 0.0
    %397 = vmatprep.subr.mxu0 0.0
    %398 = vmatpush1.msra.mxu0 0.0
    %399 = vmatprep.subr.mxu0 0.0
    %400 = vmatpush1.msra.mxu0 0.0
    %401 = vmatprep.subr.mxu0 0.0
    %402 = vmatpush1.msra.mxu0 0.0
    %403 = vmatprep.subr.mxu0 0.0
    %404 = vmatpush1.msra.mxu0 0.0
    %405 = vmatprep.subr.mxu0 0.0
    %406 = vmatpush1.msra.mxu0 0.0
    %407 = vmatprep.subr.mxu0 0.0
    %408 = vmatpush1.msra.mxu0 0.0
    %409 = vmatprep.subr.mxu0 0.0
    %410 = vmatpush1.msra.mxu0 0.0
    %411 = vmatprep.subr.mxu0 0.0
    %412 = vmatpush1.msra.mxu0 0.0
    %413 = vmatprep.subr.mxu0 0.0
    %414 = vmatpush1.msra.mxu0 0.0
    %415 = vmatprep.subr.mxu0 0.0
    %416 = vmatpush1.msra.mxu0 0.0
    %417 = vmatprep.subr.mxu0 0.0
    %418 = vmatpush1.msra.mxu0 0.0
    %419 = vmatprep.subr.mxu0 0.0
    %420 = vmatpush1.msra.mxu0 0.0
    %421 = vmatprep.subr.mxu0 0.0
    %422 = vmatpush1.msra.mxu0 0.0
    %423 = vmatprep.subr.mxu0 0.0
    %424 = vmatpush1.msra.mxu0 0.0
    %425 = vmatprep.mubr.f32.mxu0 0.0
    %v426 = vand.u32 %v105, 4294901760
    %v427 = vsub.f32 %v105, %v426
    %v428 = vand.u32 %v427, 4294901760
    %429 = vmatmul.mubr.f32.gmra.mrb[0].mxu0 %v428
    %v430 = vpop.f32.mrb[0].mxu0
    %v431 = vadd.f32 %v354, %v430
    %v432 = vpop.f32.mrb[0].mxu0
    %433 = vdwg.mxu0
    %434 = vmatprep.subr.mxu0 0.0
    %v435 = vand.u32 %v98, 4294901760
    %v436 = vsub.f32 %v98, %v435
    %v437 = vand.u32 %v436, 4294901760
    %438 = vmatpush1.msra.mxu0 %v437
    %439 = vmatprep.subr.mxu0 0.0
    %v440 = vand.u32 %v99, 4294901760
    %v441 = vsub.f32 %v99, %v440
    %v442 = vand.u32 %v441, 4294901760
    %443 = vmatpush1.msra.mxu0 %v442
    %444 = vmatprep.subr.mxu0 0.0
    %v445 = vand.u32 %v100, 4294901760
    %v446 = vsub.f32 %v100, %v445
    %v447 = vand.u32 %v446, 4294901760
    %448 = vmatpush1.msra.mxu0 %v447
    %449 = vmatprep.subr.mxu0 0.0
    %v450 = vand.u32 %v101, 4294901760
    %v451 = vsub.f32 %v101, %v450
    %v452 = vand.u32 %v451, 4294901760
    %453 = vmatpush1.msra.mxu0 %v452
    %454 = vmatprep.subr.mxu0 0.0
    %455 = vmatpush1.msra.mxu0 0.0
    %456 = vmatprep.subr.mxu0 0.0
    %457 = vmatpush1.msra.mxu0 0.0
    %458 = vmatprep.subr.mxu0 0.0
    %459 = vmatpush1.msra.mxu0 0.0
    %460 = vmatprep.subr.mxu0 0.0
    %461 = vmatpush1.msra.mxu0 0.0
    %462 = vmatprep.subr.mxu0 0.0
    %463 = vmatpush1.msra.mxu0 0.0
    %464 = vmatprep.subr.mxu0 0.0
    %465 = vmatpush1.msra.mxu0 0.0
    %466 = vmatprep.subr.mxu0 0.0
    %467 = vmatpush1.msra.mxu0 0.0
    %468 = vmatprep.subr.mxu0 0.0
    %469 = vmatpush1.msra.mxu0 0.0
    %470 = vmatprep.subr.mxu0 0.0
    %471 = vmatpush1.msra.mxu0 0.0
    %472 = vmatprep.subr.mxu0 0.0
    %473 = vmatpush1.msra.mxu0 0.0
    %474 = vmatprep.subr.mxu0 0.0
    %475 = vmatpush1.msra.mxu0 0.0
    %476 = vmatprep.subr.mxu0 0.0
    %477 = vmatpush1.msra.mxu0 0.0
    %478 = vmatprep.subr.mxu0 0.0
    %479 = vmatpush1.msra.mxu0 0.0
    %480 = vmatprep.subr.mxu0 0.0
    %481 = vmatpush1.msra.mxu0 0.0
    %482 = vmatprep.subr.mxu0 0.0
    %483 = vmatpush1.msra.mxu0 0.0
    %484 = vmatprep.subr.mxu0 0.0
    %485 = vmatpush1.msra.mxu0 0.0
    %486 = vmatprep.subr.mxu0 0.0
    %487 = vmatpush1.msra.mxu0 0.0
    %488 = vmatprep.subr.mxu0 0.0
    %489 = vmatpush1.msra.mxu0 0.0
    %490 = vmatprep.subr.mxu0 0.0
    %491 = vmatpush1.msra.mxu0 0.0
    %492 = vmatprep.subr.mxu0 0.0
    %493 = vmatpush1.msra.mxu0 0.0
    %494 = vmatprep.subr.mxu0 0.0
    %495 = vmatpush1.msra.mxu0 0.0
    %496 = vmatprep.subr.mxu0 0.0
    %497 = vmatpush1.msra.mxu0 0.0
    %498 = vmatprep.subr.mxu0 0.0
    %499 = vmatpush1.msra.mxu0 0.0
    %500 = vmatprep.subr.mxu0 0.0
    %501 = vmatpush1.msra.mxu0 0.0
    %502 = vmatprep.subr.mxu0 0.0
    %503 = vmatpush1.msra.mxu0 0.0
    %504 = vmatprep.subr.mxu0 0.0
    %505 = vmatpush1.msra.mxu0 0.0
    %506 = vmatprep.subr.mxu0 0.0
    %507 = vmatpush1.msra.mxu0 0.0
    %508 = vmatprep.subr.mxu0 0.0
    %509 = vmatpush1.msra.mxu0 0.0
    %510 = vmatprep.mubr.f32.mxu0 0.0
    %v511 = vand.u32 %v105, 4294901760
    %512 = vmatmul.mubr.f32.gmra.mrb[0].mxu0 %v511
    %v513 = vpop.f32.mrb[0].mxu0
    %v514 = vadd.f32 %v431, %v513
    %v515 = vpop.f32.mrb[0].mxu0
    %516 = vdwg.mxu0
    %517 = vmatprep.subr.mxu0 0.0
    %v518 = vand.u32 %v98, 4294901760
    %519 = vmatpush1.msra.mxu0 %v518
    %520 = vmatprep.subr.mxu0 0.0
    %v521 = vand.u32 %v99, 4294901760
    %522 = vmatpush1.msra.mxu0 %v521
    %523 = vmatprep.subr.mxu0 0.0
    %v524 = vand.u32 %v100, 4294901760
    %525 = vmatpush1.msra.mxu0 %v524
    %526 = vmatprep.subr.mxu0 0.0
    %v527 = vand.u32 %v101, 4294901760
    %528 = vmatpush1.msra.mxu0 %v527
    %529 = vmatprep.subr.mxu0 0.0
    %530 = vmatpush1.msra.mxu0 0.0
    %531 = vmatprep.subr.mxu0 0.0
    %532 = vmatpush1.msra.mxu0 0.0
    %533 = vmatprep.subr.mxu0 0.0
    %534 = vmatpush1.msra.mxu0 0.0
    %535 = vmatprep.subr.mxu0 0.0
    %536 = vmatpush1.msra.mxu0 0.0
    %537 = vmatprep.subr.mxu0 0.0
    %538 = vmatpush1.msra.mxu0 0.0
    %539 = vmatprep.subr.mxu0 0.0
    %540 = vmatpush1.msra.mxu0 0.0
    %541 = vmatprep.subr.mxu0 0.0
    %542 = vmatpush1.msra.mxu0 0.0
    %543 = vmatprep.subr.mxu0 0.0
    %544 = vmatpush1.msra.mxu0 0.0
    %545 = vmatprep.subr.mxu0 0.0
    %546 = vmatpush1.msra.mxu0 0.0
    %547 = vmatprep.subr.mxu0 0.0
    %548 = vmatpush1.msra.mxu0 0.0
    %549 = vmatprep.subr.mxu0 0.0
    %550 = vmatpush1.msra.mxu0 0.0
    %551 = vmatprep.subr.mxu0 0.0
    %552 = vmatpush1.msra.mxu0 0.0
    %553 = vmatprep.subr.mxu0 0.0
    %554 = vmatpush1.msra.mxu0 0.0
    %555 = vmatprep.subr.mxu0 0.0
    %556 = vmatpush1.msra.mxu0 0.0
    %557 = vmatprep.subr.mxu0 0.0
    %558 = vmatpush1.msra.mxu0 0.0
    %559 = vmatprep.subr.mxu0 0.0
    %560 = vmatpush1.msra.mxu0 0.0
    %561 = vmatprep.subr.mxu0 0.0
    %562 = vmatpush1.msra.mxu0 0.0
    %563 = vmatprep.subr.mxu0 0.0
    %564 = vmatpush1.msra.mxu0 0.0
    %565 = vmatprep.subr.mxu0 0.0
    %566 = vmatpush1.msra.mxu0 0.0
    %567 = vmatprep.subr.mxu0 0.0
    %568 = vmatpush1.msra.mxu0 0.0
    %569 = vmatprep.subr.mxu0 0.0
    %570 = vmatpush1.msra.mxu0 0.0
    %571 = vmatprep.subr.mxu0 0.0
    %572 = vmatpush1.msra.mxu0 0.0
    %573 = vmatprep.subr.mxu0 0.0
    %574 = vmatpush1.msra.mxu0 0.0
    %575 = vmatprep.subr.mxu0 0.0
    %576 = vmatpush1.msra.mxu0 0.0
    %577 = vmatprep.subr.mxu0 0.0
    %578 = vmatpush1.msra.mxu0 0.0
    %579 = vmatprep.subr.mxu0 0.0
    %580 = vmatpush1.msra.mxu0 0.0
    %581 = vmatprep.subr.mxu0 0.0
    %582 = vmatpush1.msra.mxu0 0.0
    %583 = vmatprep.subr.mxu0 0.0
    %584 = vmatpush1.msra.mxu0 0.0
    %585 = vmatprep.mubr.f32.mxu0 0.0
    %v586 = vand.u32 %v105, 4294901760
    %587 = vmatmul.mubr.f32.gmra.mrb[0].mxu0 %v586
    %v588 = vpop.f32.mrb[0].mxu0
    %v589 = vadd.f32 %v514, %v588
    %v590 = vpop.f32.mrb[0].mxu0
    %591 = vdwg.mxu0
    %v592 = vld [vmem:[#allocation6] sm:$0x3]
    %v594 = vsel %vm103, %v592, 0
    %596 = vmatprep.subr.mxu0 0.0
    %v597 = vand.u32 %v98, 4294901760
    %598 = vmatpush1.msra.mxu0 %v597
    %599 = vmatprep.subr.mxu0 0.0
    %v600 = vand.u32 %v99, 4294901760
    %601 = vmatpush1.msra.mxu0 %v600
    %602 = vmatprep.subr.mxu0 0.0
    %v603 = vand.u32 %v100, 4294901760
    %604 = vmatpush1.msra.mxu0 %v603
    %605 = vmatprep.subr.mxu0 0.0
    %v606 = vand.u32 %v101, 4294901760
    %607 = vmatpush1.msra.mxu0 %v606
    %608 = vmatprep.subr.mxu0 0.0
    %609 = vmatpush1.msra.mxu0 0.0
    %610 = vmatprep.subr.mxu0 0.0
    %611 = vmatpush1.msra.mxu0 0.0
    %612 = vmatprep.subr.mxu0 0.0
    %613 = vmatpush1.msra.mxu0 0.0
    %614 = vmatprep.subr.mxu0 0.0
    %615 = vmatpush1.msra.mxu0 0.0
    %616 = vmatprep.subr.mxu0 0.0
    %617 = vmatpush1.msra.mxu0 0.0
    %618 = vmatprep.subr.mxu0 0.0
    %619 = vmatpush1.msra.mxu0 0.0
    %620 = vmatprep.subr.mxu0 0.0
    %621 = vmatpush1.msra.mxu0 0.0
    %622 = vmatprep.subr.mxu0 0.0
    %623 = vmatpush1.msra.mxu0 0.0
    %624 = vmatprep.subr.mxu0 0.0
    %625 = vmatpush1.msra.mxu0 0.0
    %626 = vmatprep.subr.mxu0 0.0
    %627 = vmatpush1.msra.mxu0 0.0
    %628 = vmatprep.subr.mxu0 0.0
    %629 = vmatpush1.msra.mxu0 0.0
    %630 = vmatprep.subr.mxu0 0.0
    %631 = vmatpush1.msra.mxu0 0.0
    %632 = vmatprep.subr.mxu0 0.0
    %633 = vmatpush1.msra.mxu0 0.0
    %634 = vmatprep.subr.mxu0 0.0
    %635 = vmatpush1.msra.mxu0 0.0
    %636 = vmatprep.subr.mxu0 0.0
    %637 = vmatpush1.msra.mxu0 0.0
    %638 = vmatprep.subr.mxu0 0.0
    %639 = vmatpush1.msra.mxu0 0.0
    %640 = vmatprep.subr.mxu0 0.0
    %641 = vmatpush1.msra.mxu0 0.0
    %642 = vmatprep.subr.mxu0 0.0
    %643 = vmatpush1.msra.mxu0 0.0
    %644 = vmatprep.subr.mxu0 0.0
    %645 = vmatpush1.msra.mxu0 0.0
    %646 = vmatprep.subr.mxu0 0.0
    %647 = vmatpush1.msra.mxu0 0.0
    %648 = vmatprep.subr.mxu0 0.0
    %649 = vmatpush1.msra.mxu0 0.0
    %650 = vmatprep.subr.mxu0 0.0
    %651 = vmatpush1.msra.mxu0 0.0
    %652 = vmatprep.subr.mxu0 0.0
    %653 = vmatpush1.msra.mxu0 0.0
    %654 = vmatprep.subr.mxu0 0.0
    %655 = vmatpush1.msra.mxu0 0.0
    %656 = vmatprep.subr.mxu0 0.0
    %657 = vmatpush1.msra.mxu0 0.0
    %658 = vmatprep.subr.mxu0 0.0
    %659 = vmatpush1.msra.mxu0 0.0
    %660 = vmatprep.subr.mxu0 0.0
    %661 = vmatpush1.msra.mxu0 0.0
    %662 = vmatprep.subr.mxu0 0.0
    %663 = vmatpush1.msra.mxu0 0.0
    %664 = vmatprep.mubr.f32.mxu0 0.0
    %v665 = vand.u32 %v594, 4294901760
    %v666 = vsub.f32 %v594, %v665
    %v667 = vand.u32 %v666, 4294901760
    %v668 = vsub.f32 %v666, %v667
    %v669 = vand.u32 %v668, 4294901760
    %670 = vmatmul.mubr.f32.gmra.mrb[0].mxu0 %v669
    %v671 = vpop.f32.mrb[0].mxu0
    %v672 = vadd.f32 0.0, %v671
    %v673 = vpop.f32.mrb[0].mxu0
    %674 = vdwg.mxu0
    %675 = vmatprep.subr.mxu0 0.0
    %v676 = vand.u32 %v98, 4294901760
    %v677 = vsub.f32 %v98, %v676
    %v678 = vand.u32 %v677, 4294901760
    %v679 = vsub.f32 %v677, %v678
    %v680 = vand.u32 %v679, 4294901760
    %681 = vmatpush1.msra.mxu0 %v680
    %682 = vmatprep.subr.mxu0 0.0
    %v683 = vand.u32 %v99, 4294901760
    %v684 = vsub.f32 %v99, %v683
    %v685 = vand.u32 %v684, 4294901760
    %v686 = vsub.f32 %v684, %v685
    %v687 = vand.u32 %v686, 4294901760
    %688 = vmatpush1.msra.mxu0 %v687
    %689 = vmatprep.subr.mxu0 0.0
    %v690 = vand.u32 %v100, 4294901760
    %v691 = vsub.f32 %v100, %v690
    %v692 = vand.u32 %v691, 4294901760
    %v693 = vsub.f32 %v691, %v692
    %v694 = vand.u32 %v693, 4294901760
    %695 = vmatpush1.msra.mxu0 %v694
    %696 = vmatprep.subr.mxu0 0.0
    %v697 = vand.u32 %v101, 4294901760
    %v698 = vsub.f32 %v101, %v697
    %v699 = vand.u32 %v698, 4294901760
    %v700 = vsub.f32 %v698, %v699
    %v701 = vand.u32 %v700, 4294901760
    %702 = vmatpush1.msra.mxu0 %v701
    %703 = vmatprep.subr.mxu0 0.0
    %704 = vmatpush1.msra.mxu0 0.0
    %705 = vmatprep.subr.mxu0 0.0
    %706 = vmatpush1.msra.mxu0 0.0
    %707 = vmatprep.subr.mxu0 0.0
    %708 = vmatpush1.msra.mxu0 0.0
    %709 = vmatprep.subr.mxu0 0.0
    %710 = vmatpush1.msra.mxu0 0.0
    %711 = vmatprep.subr.mxu0 0.0
    %712 = vmatpush1.msra.mxu0 0.0
    %713 = vmatprep.subr.mxu0 0.0
    %714 = vmatpush1.msra.mxu0 0.0
    %715 = vmatprep.subr.mxu0 0.0
    %716 = vmatpush1.msra.mxu0 0.0
    %717 = vmatprep.subr.mxu0 0.0
    %718 = vmatpush1.msra.mxu0 0.0
    %719 = vmatprep.subr.mxu0 0.0
    %720 = vmatpush1.msra.mxu0 0.0
    %721 = vmatprep.subr.mxu0 0.0
    %722 = vmatpush1.msra.mxu0 0.0
    %723 = vmatprep.subr.mxu0 0.0
    %724 = vmatpush1.msra.mxu0 0.0
    %725 = vmatprep.subr.mxu0 0.0
    %726 = vmatpush1.msra.mxu0 0.0
    %727 = vmatprep.subr.mxu0 0.0
    %728 = vmatpush1.msra.mxu0 0.0
    %729 = vmatprep.subr.mxu0 0.0
    %730 = vmatpush1.msra.mxu0 0.0
    %731 = vmatprep.subr.mxu0 0.0
    %732 = vmatpush1.msra.mxu0 0.0
    %733 = vmatprep.subr.mxu0 0.0
    %734 = vmatpush1.msra.mxu0 0.0
    %735 = vmatprep.subr.mxu0 0.0
    %736 = vmatpush1.msra.mxu0 0.0
    %737 = vmatprep.subr.mxu0 0.0
    %738 = vmatpush1.msra.mxu0 0.0
    %739 = vmatprep.subr.mxu0 0.0
    %740 = vmatpush1.msra.mxu0 0.0
    %741 = vmatprep.subr.mxu0 0.0
    %742 = vmatpush1.msra.mxu0 0.0
    %743 = vmatprep.subr.mxu0 0.0
    %744 = vmatpush1.msra.mxu0 0.0
    %745 = vmatprep.subr.mxu0 0.0
    %746 = vmatpush1.msra.mxu0 0.0
    %747 = vmatprep.subr.mxu0 0.0
    %748 = vmatpush1.msra.mxu0 0.0
    %749 = vmatprep.subr.mxu0 0.0
    %750 = vmatpush1.msra.mxu0 0.0
    %751 = vmatprep.subr.mxu0 0.0
    %752 = vmatpush1.msra.mxu0 0.0
    %753 = vmatprep.subr.mxu0 0.0
    %754 = vmatpush1.msra.mxu0 0.0
    %755 = vmatprep.subr.mxu0 0.0
    %756 = vmatpush1.msra.mxu0 0.0
    %757 = vmatprep.subr.mxu0 0.0
    %758 = vmatpush1.msra.mxu0 0.0
    %759 = vmatprep.mubr.f32.mxu0 0.0
    %v760 = vand.u32 %v594, 4294901760
    %761 = vmatmul.mubr.f32.gmra.mrb[0].mxu0 %v760
    %v762 = vpop.f32.mrb[0].mxu0
    %v763 = vadd.f32 %v672, %v762
    %v764 = vpop.f32.mrb[0].mxu0
    %765 = vdwg.mxu0
    %766 = vmatprep.subr.mxu0 0.0
    %v767 = vand.u32 %v98, 4294901760
    %v768 = vsub.f32 %v98, %v767
    %769 = vmatpush1.msra.mxu0 %v768
    %770 = vmatprep.subr.mxu0 0.0
    %v771 = vand.u32 %v99, 4294901760
    %v772 = vsub.f32 %v99, %v771
    %773 = vmatpush1.msra.mxu0 %v772
    %774 = vmatprep.subr.mxu0 0.0
    %v775 = vand.u32 %v100, 4294901760
    %v776 = vsub.f32 %v100, %v775
    %777 = vmatpush1.msra.mxu0 %v776
    %778 = vmatprep.subr.mxu0 0.0
    %v779 = vand.u32 %v101, 4294901760
    %v780 = vsub.f32 %v101, %v779
    %781 = vmatpush1.msra.mxu0 %v780
    %782 = vmatprep.subr.mxu0 0.0
    %783 = vmatpush1.msra.mxu0 0.0
    %784 = vmatprep.subr.mxu0 0.0
    %785 = vmatpush1.msra.mxu0 0.0
    %786 = vmatprep.subr.mxu0 0.0
    %787 = vmatpush1.msra.mxu0 0.0
    %788 = vmatprep.subr.mxu0 0.0
    %789 = vmatpush1.msra.mxu0 0.0
    %790 = vmatprep.subr.mxu0 0.0
    %791 = vmatpush1.msra.mxu0 0.0
    %792 = vmatprep.subr.mxu0 0.0
    %793 = vmatpush1.msra.mxu0 0.0
    %794 = vmatprep.subr.mxu0 0.0
    %795 = vmatpush1.msra.mxu0 0.0
    %796 = vmatprep.subr.mxu0 0.0
    %797 = vmatpush1.msra.mxu0 0.0
    %798 = vmatprep.subr.mxu0 0.0
    %799 = vmatpush1.msra.mxu0 0.0
    %800 = vmatprep.subr.mxu0 0.0
    %801 = vmatpush1.msra.mxu0 0.0
    %802 = vmatprep.subr.mxu0 0.0
    %803 = vmatpush1.msra.mxu0 0.0
    %804 = vmatprep.subr.mxu0 0.0
    %805 = vmatpush1.msra.mxu0 0.0
    %806 = vmatprep.subr.mxu0 0.0
    %807 = vmatpush1.msra.mxu0 0.0
    %808 = vmatprep.subr.mxu0 0.0
    %809 = vmatpush1.msra.mxu0 0.0
    %810 = vmatprep.subr.mxu0 0.0
    %811 = vmatpush1.msra.mxu0 0.0
    %812 = vmatprep.subr.mxu0 0.0
    %813 = vmatpush1.msra.mxu0 0.0
    %814 = vmatprep.subr.mxu0 0.0
    %815 = vmatpush1.msra.mxu0 0.0
    %816 = vmatprep.subr.mxu0 0.0
    %817 = vmatpush1.msra.mxu0 0.0
    %818 = vmatprep.subr.mxu0 0.0
    %819 = vmatpush1.msra.mxu0 0.0
    %820 = vmatprep.subr.mxu0 0.0
    %821 = vmatpush1.msra.mxu0 0.0
    %822 = vmatprep.subr.mxu0 0.0
    %823 = vmatpush1.msra.mxu0 0.0
    %824 = vmatprep.subr.mxu0 0.0
    %825 = vmatpush1.msra.mxu0 0.0
    %826 = vmatprep.subr.mxu0 0.0
    %827 = vmatpush1.msra.mxu0 0.0
    %828 = vmatprep.subr.mxu0 0.0
    %829 = vmatpush1.msra.mxu0 0.0
    %830 = vmatprep.subr.mxu0 0.0
    %831 = vmatpush1.msra.mxu0 0.0
    %832 = vmatprep.subr.mxu0 0.0
    %833 = vmatpush1.msra.mxu0 0.0
    %834 = vmatprep.subr.mxu0 0.0
    %835 = vmatpush1.msra.mxu0 0.0
    %836 = vmatprep.subr.mxu0 0.0
    %837 = vmatpush1.msra.mxu0 0.0
    %838 = vmatprep.mubr.f32.mxu0 0.0
    %v839 = vand.u32 %v594, 4294901760
    %v840 = vsub.f32 %v594, %v839
    %841 = vmatmul.mubr.f32.gmra.mrb[0].mxu0 %v840
    %v842 = vpop.f32.mrb[0].mxu0
    %v843 = vadd.f32 %v763, %v842
    %v844 = vpop.f32.mrb[0].mxu0
    %845 = vdwg.mxu0
    %846 = vmatprep.subr.mxu0 0.0
    %v847 = vand.u32 %v98, 4294901760
    %848 = vmatpush1.msra.mxu0 %v847
    %849 = vmatprep.subr.mxu0 0.0
    %v850 = vand.u32 %v99, 4294901760
    %851 = vmatpush1.msra.mxu0 %v850
    %852 = vmatprep.subr.mxu0 0.0
    %v853 = vand.u32 %v100, 4294901760
    %854 = vmatpush1.msra.mxu0 %v853
    %855 = vmatprep.subr.mxu0 0.0
    %v856 = vand.u32 %v101, 4294901760
    %857 = vmatpush1.msra.mxu0 %v856
    %858 = vmatprep.subr.mxu0 0.0
    %859 = vmatpush1.msra.mxu0 0.0
    %860 = vmatprep.subr.mxu0 0.0
    %861 = vmatpush1.msra.mxu0 0.0
    %862 = vmatprep.subr.mxu0 0.0
    %863 = vmatpush1.msra.mxu0 0.0
    %864 = vmatprep.subr.mxu0 0.0
    %865 = vmatpush1.msra.mxu0 0.0
    %866 = vmatprep.subr.mxu0 0.0
    %867 = vmatpush1.msra.mxu0 0.0
    %868 = vmatprep.subr.mxu0 0.0
    %869 = vmatpush1.msra.mxu0 0.0
    %870 = vmatprep.subr.mxu0 0.0
    %871 = vmatpush1.msra.mxu0 0.0
    %872 = vmatprep.subr.mxu0 0.0
    %873 = vmatpush1.msra.mxu0 0.0
    %874 = vmatprep.subr.mxu0 0.0
    %875 = vmatpush1.msra.mxu0 0.0
    %876 = vmatprep.subr.mxu0 0.0
    %877 = vmatpush1.msra.mxu0 0.0
    %878 = vmatprep.subr.mxu0 0.0
    %879 = vmatpush1.msra.mxu0 0.0
    %880 = vmatprep.subr.mxu0 0.0
    %881 = vmatpush1.msra.mxu0 0.0
    %882 = vmatprep.subr.mxu0 0.0
    %883 = vmatpush1.msra.mxu0 0.0
    %884 = vmatprep.subr.mxu0 0.0
    %885 = vmatpush1.msra.mxu0 0.0
    %886 = vmatprep.subr.mxu0 0.0
    %887 = vmatpush1.msra.mxu0 0.0
    %888 = vmatprep.subr.mxu0 0.0
    %889 = vmatpush1.msra.mxu0 0.0
    %890 = vmatprep.subr.mxu0 0.0
    %891 = vmatpush1.msra.mxu0 0.0
    %892 = vmatprep.subr.mxu0 0.0
    %893 = vmatpush1.msra.mxu0 0.0
    %894 = vmatprep.subr.mxu0 0.0
    %895 = vmatpush1.msra.mxu0 0.0
    %896 = vmatprep.subr.mxu0 0.0
    %897 = vmatpush1.msra.mxu0 0.0
    %898 = vmatprep.subr.mxu0 0.0
    %899 = vmatpush1.msra.mxu0 0.0
    %900 = vmatprep.subr.mxu0 0.0
    %901 = vmatpush1.msra.mxu0 0.0
    %902 = vmatprep.subr.mxu0 0.0
    %903 = vmatpush1.msra.mxu0 0.0
    %904 = vmatprep.subr.mxu0 0.0
    %905 = vmatpush1.msra.mxu0 0.0
    %906 = vmatprep.subr.mxu0 0.0
    %907 = vmatpush1.msra.mxu0 0.0
    %908 = vmatprep.subr.mxu0 0.0
    %909 = vmatpush1.msra.mxu0 0.0
    %910 = vmatprep.subr.mxu0 0.0
    %911 = vmatpush1.msra.mxu0 0.0
    %912 = vmatprep.subr.mxu0 0.0
    %913 = vmatpush1.msra.mxu0 0.0
    %914 = vmatprep.mubr.f32.mxu0 0.0
    %v915 = vand.u32 %v594, 4294901760
    %v916 = vsub.f32 %v594, %v915
    %v917 = vand.u32 %v916, 4294901760
    %918 = vmatmul.mubr.f32.gmra.mrb[0].mxu0 %v917
    %v919 = vpop.f32.mrb[0].mxu0
    %v920 = vadd.f32 %v843, %v919
    %v921 = vpop.f32.mrb[0].mxu0
    %922 = vdwg.mxu0
    %923 = vmatprep.subr.mxu0 0.0
    %v924 = vand.u32 %v98, 4294901760
    %v925 = vsub.f32 %v98, %v924
    %v926 = vand.u32 %v925, 4294901760
    %927 = vmatpush1.msra.mxu0 %v926
    %928 = vmatprep.subr.mxu0 0.0
    %v929 = vand.u32 %v99, 4294901760
    %v930 = vsub.f32 %v99, %v929
    %v931 = vand.u32 %v930, 4294901760
    %932 = vmatpush1.msra.mxu0 %v931
    %933 = vmatprep.subr.mxu0 0.0
    %v934 = vand.u32 %v100, 4294901760
    %v935 = vsub.f32 %v100, %v934
    %v936 = vand.u32 %v935, 4294901760
    %937 = vmatpush1.msra.mxu0 %v936
    %938 = vmatprep.subr.mxu0 0.0
    %v939 = vand.u32 %v101, 4294901760
    %v940 = vsub.f32 %v101, %v939
    %v941 = vand.u32 %v940, 4294901760
    %942 = vmatpush1.msra.mxu0 %v941
    %943 = vmatprep.subr.mxu0 0.0
    %944 = vmatpush1.msra.mxu0 0.0
    %945 = vmatprep.subr.mxu0 0.0
    %946 = vmatpush1.msra.mxu0 0.0
    %947 = vmatprep.subr.mxu0 0.0
    %948 = vmatpush1.msra.mxu0 0.0
    %949 = vmatprep.subr.mxu0 0.0
    %950 = vmatpush1.msra.mxu0 0.0
    %951 = vmatprep.subr.mxu0 0.0
    %952 = vmatpush1.msra.mxu0 0.0
    %953 = vmatprep.subr.mxu0 0.0
    %954 = vmatpush1.msra.mxu0 0.0
    %955 = vmatprep.subr.mxu0 0.0
    %956 = vmatpush1.msra.mxu0 0.0
    %957 = vmatprep.subr.mxu0 0.0
    %958 = vmatpush1.msra.mxu0 0.0
    %959 = vmatprep.subr.mxu0 0.0
    %960 = vmatpush1.msra.mxu0 0.0
    %961 = vmatprep.subr.mxu0 0.0
    %962 = vmatpush1.msra.mxu0 0.0
    %963 = vmatprep.subr.mxu0 0.0
    %964 = vmatpush1.msra.mxu0 0.0
    %965 = vmatprep.subr.mxu0 0.0
    %966 = vmatpush1.msra.mxu0 0.0
    %967 = vmatprep.subr.mxu0 0.0
    %968 = vmatpush1.msra.mxu0 0.0
    %969 = vmatprep.subr.mxu0 0.0
    %970 = vmatpush1.msra.mxu0 0.0
    %971 = vmatprep.subr.mxu0 0.0
    %972 = vmatpush1.msra.mxu0 0.0
    %973 = vmatprep.subr.mxu0 0.0
    %974 = vmatpush1.msra.mxu0 0.0
    %975 = vmatprep.subr.mxu0 0.0
    %976 = vmatpush1.msra.mxu0 0.0
    %977 = vmatprep.subr.mxu0 0.0
    %978 = vmatpush1.msra.mxu0 0.0
    %979 = vmatprep.subr.mxu0 0.0
    %980 = vmatpush1.msra.mxu0 0.0
    %981 = vmatprep.subr.mxu0 0.0
    %982 = vmatpush1.msra.mxu0 0.0
    %983 = vmatprep.subr.mxu0 0.0
    %984 = vmatpush1.msra.mxu0 0.0
    %985 = vmatprep.subr.mxu0 0.0
    %986 = vmatpush1.msra.mxu0 0.0
    %987 = vmatprep.subr.mxu0 0.0
    %988 = vmatpush1.msra.mxu0 0.0
    %989 = vmatprep.subr.mxu0 0.0
    %990 = vmatpush1.msra.mxu0 0.0
    %991 = vmatprep.subr.mxu0 0.0
    %992 = vmatpush1.msra.mxu0 0.0
    %993 = vmatprep.subr.mxu0 0.0
    %994 = vmatpush1.msra.mxu0 0.0
    %995 = vmatprep.subr.mxu0 0.0
    %996 = vmatpush1.msra.mxu0 0.0
    %997 = vmatprep.subr.mxu0 0.0
    %998 = vmatpush1.msra.mxu0 0.0
    %999 = vmatprep.mubr.f32.mxu0 0.0
    %v1000 = vand.u32 %v594, 4294901760
    %1001 = vmatmul.mubr.f32.gmra.mrb[0].mxu0 %v1000
    %v1002 = vpop.f32.mrb[0].mxu0
    %v1003 = vadd.f32 %v920, %v1002
    %v1004 = vpop.f32.mrb[0].mxu0
    %1005 = vdwg.mxu0
    %1006 = vmatprep.subr.mxu0 0.0
    %v1007 = vand.u32 %v98, 4294901760
    %1008 = vmatpush1.msra.mxu0 %v1007
    %1009 = vmatprep.subr.mxu0 0.0
    %v1010 = vand.u32 %v99, 4294901760
    %1011 = vmatpush1.msra.mxu0 %v1010
    %1012 = vmatprep.subr.mxu0 0.0
    %v1013 = vand.u32 %v100, 4294901760
    %1014 = vmatpush1.msra.mxu0 %v1013
    %1015 = vmatprep.subr.mxu0 0.0
    %v1016 = vand.u32 %v101, 4294901760
    %1017 = vmatpush1.msra.mxu0 %v1016
    %1018 = vmatprep.subr.mxu0 0.0
    %1019 = vmatpush1.msra.mxu0 0.0
    %1020 = vmatprep.subr.mxu0 0.0
    %1021 = vmatpush1.msra.mxu0 0.0
    %1022 = vmatprep.subr.mxu0 0.0
    %1023 = vmatpush1.msra.mxu0 0.0
    %1024 = vmatprep.subr.mxu0 0.0
    %1025 = vmatpush1.msra.mxu0 0.0
    %1026 = vmatprep.subr.mxu0 0.0
    %1027 = vmatpush1.msra.mxu0 0.0
    %1028 = vmatprep.subr.mxu0 0.0
    %1029 = vmatpush1.msra.mxu0 0.0
    %1030 = vmatprep.subr.mxu0 0.0
    %1031 = vmatpush1.msra.mxu0 0.0
    %1032 = vmatprep.subr.mxu0 0.0
    %1033 = vmatpush1.msra.mxu0 0.0
    %1034 = vmatprep.subr.mxu0 0.0
    %1035 = vmatpush1.msra.mxu0 0.0
    %1036 = vmatprep.subr.mxu0 0.0
    %1037 = vmatpush1.msra.mxu0 0.0
    %1038 = vmatprep.subr.mxu0 0.0
    %1039 = vmatpush1.msra.mxu0 0.0
    %1040 = vmatprep.subr.mxu0 0.0
    %1041 = vmatpush1.msra.mxu0 0.0
    %1042 = vmatprep.subr.mxu0 0.0
    %1043 = vmatpush1.msra.mxu0 0.0
    %1044 = vmatprep.subr.mxu0 0.0
    %1045 = vmatpush1.msra.mxu0 0.0
    %1046 = vmatprep.subr.mxu0 0.0
    %1047 = vmatpush1.msra.mxu0 0.0
    %1048 = vmatprep.subr.mxu0 0.0
    %1049 = vmatpush1.msra.mxu0 0.0
    %1050 = vmatprep.subr.mxu0 0.0
    %1051 = vmatpush1.msra.mxu0 0.0
    %1052 = vmatprep.subr.mxu0 0.0
    %1053 = vmatpush1.msra.mxu0 0.0
    %1054 = vmatprep.subr.mxu0 0.0
    %1055 = vmatpush1.msra.mxu0 0.0
    %1056 = vmatprep.subr.mxu0 0.0
    %1057 = vmatpush1.msra.mxu0 0.0
    %1058 = vmatprep.subr.mxu0 0.0
    %1059 = vmatpush1.msra.mxu0 0.0
    %1060 = vmatprep.subr.mxu0 0.0
    %1061 = vmatpush1.msra.mxu0 0.0
    %1062 = vmatprep.subr.mxu0 0.0
    %1063 = vmatpush1.msra.mxu0 0.0
    %1064 = vmatprep.subr.mxu0 0.0
    %1065 = vmatpush1.msra.mxu0 0.0
    %1066 = vmatprep.subr.mxu0 0.0
    %1067 = vmatpush1.msra.mxu0 0.0
    %1068 = vmatprep.subr.mxu0 0.0
    %1069 = vmatpush1.msra.mxu0 0.0
    %1070 = vmatprep.subr.mxu0 0.0
    %1071 = vmatpush1.msra.mxu0 0.0
    %1072 = vmatprep.subr.mxu0 0.0
    %1073 = vmatpush1.msra.mxu0 0.0
    %1074 = vmatprep.mubr.f32.mxu0 0.0
    %v1075 = vand.u32 %v594, 4294901760
    %1076 = vmatmul.mubr.f32.gmra.mrb[0].mxu0 %v1075
    %v1077 = vpop.f32.mrb[0].mxu0
    %v1078 = vadd.f32 %v1003, %v1077
    %v1079 = vpop.f32.mrb[0].mxu0
    %1080 = vdwg.mxu0
    %v1081 = vld [vmem:[%s5] sm:$0xff]
    %v1082 = vld [vmem:[%s5 + $0x8] sm:$0xff]
    %v1085 = vunpack.c.l.s4 1966171168
    %v1086 = vunpack.c.0.s8 %v1085
    %v1087 = vlaneseq
    %v1088 = vshrl.u32 %v1087, 7
    %v1089 = vsub.s32 %v1086, %v1088
    %v1090 = vrot.slane %v589, %v1089
    %v1091 = vcombine.high %v1090, %v1090
    %v1093 = vunpack.c.l.s4 1966171168
    %v1094 = vunpack.c.0.s8 %v1093
    %v1095 = vlaneseq
    %v1096 = vshrl.u32 %v1095, 7
    %v1097 = vsub.s32 %v1094, %v1096
    %v1098 = vrot.slane %v1090, %v1097
    %v1100 = vunpack.c.l.s4 1966171168
    %v1101 = vunpack.c.0.s8 %v1100
    %v1102 = vlaneseq
    %v1103 = vshrl.u32 %v1102, 7
    %v1104 = vsub.s32 %v1101, %v1103
    %v1105 = vrot.slane %v1091, %v1104
    %v1106 = vlaneseq
    %v1107 = vshrl.u32 %v1106, 7
    %v1108 = vsub.s32 0, %v1107
    %v1109 = vrot.slane %v1098, %v1108
    %v1110 = vlaneseq
    %v1111 = vshrl.u32 %v1110, 7
    %v1112 = vsub.s32 0, %v1111
    %v1113 = vrot.slane %v1105, %v1112
    %v1116 = vmul.f32 %v1081, %v1109
    %v1117 = vmul.f32 %v1082, %v1113
    %v1118 = vsel %vm103, %v1116, 0.0
    %1119 = vadd.xlane.f32.xlu0 %v1118
    %v1120 = vpop.xlane.xlu0 %1119
    %v1121 = vsel %vm103, %v1117, 0.0
    %1122 = vadd.xlane.f32.xlu0 %v1121
    %v1123 = vpop.xlane.xlu0 %1122
    %v1124 = vstv %s97
    %v1125 = vadd.f32 %v1120, %v1124
    %v1126 = vadd.f32 %v1123, %v1124
    %v1129 = vlaneseq
    %v1130 = vand.u32 %v1129, 127
    %v1131 = vlaneseq
    %v1132 = vshrl.u32 %v1131, 7
    %v1133 = vsub.s32 %v1130, %v1132
    %v1134 = vrot.slane %v1125, %v1133
    %v1135 = vlaneseq
    %v1136 = vshrl.u32 %v1135, 7
    %v1137 = vsub.s32 %v1130, %v1136
    %v1138 = vrot.slane %v1126, %v1137
    %vm1141 = vcmask 57344
    %1142 = vst.msk [vmem:[#allocation12] sm:$0x1] %vm1141, %v1134
    %1143 = vst.msk [vmem:[#allocation12 + $0x4] sm:$0x1] %vm1141, %v1138
    %v1144 = vld [vmem:[#allocation8] sm:$0xff]
    %v1145 = vld [vmem:[#allocation8 + $0x8] sm:$0xff]
    %v1148 = vunpack.c.l.s4 1966171168
    %v1149 = vunpack.c.0.s8 %v1148
    %v1150 = vlaneseq
    %v1151 = vshrl.u32 %v1150, 7
    %v1152 = vsub.s32 %v1149, %v1151
    %v1153 = vrot.slane %v1078, %v1152
    %v1154 = vcombine.high %v1153, %v1153
    %v1156 = vunpack.c.l.s4 1966171168
    %v1157 = vunpack.c.0.s8 %v1156
    %v1158 = vlaneseq
    %v1159 = vshrl.u32 %v1158, 7
    %v1160 = vsub.s32 %v1157, %v1159
    %v1161 = vrot.slane %v1153, %v1160
    %v1163 = vunpack.c.l.s4 1966171168
    %v1164 = vunpack.c.0.s8 %v1163
    %v1165 = vlaneseq
    %v1166 = vshrl.u32 %v1165, 7
    %v1167 = vsub.s32 %v1164, %v1166
    %v1168 = vrot.slane %v1154, %v1167
    %v1169 = vlaneseq
    %v1170 = vshrl.u32 %v1169, 7
    %v1171 = vsub.s32 0, %v1170
    %v1172 = vrot.slane %v1161, %v1171
    %v1173 = vlaneseq
    %v1174 = vshrl.u32 %v1173, 7
    %v1175 = vsub.s32 0, %v1174
    %v1176 = vrot.slane %v1168, %v1175
    %v1179 = vmul.f32 %v1144, %v1172
    %v1180 = vmul.f32 %v1145, %v1176
    %v1181 = vsel %vm103, %v1179, 0.0
    %1182 = vadd.xlane.f32.xlu0 %v1181
    %v1183 = vpop.xlane.xlu0 %1182
    %v1184 = vsel %vm103, %v1180, 0.0
    %1185 = vadd.xlane.f32.xlu0 %v1184
    %v1186 = vpop.xlane.xlu0 %1185
    %v1187 = vadd.f32 %v1183, %v1124
    %v1188 = vadd.f32 %v1186, %v1124
    %v1191 = vlaneseq
    %v1192 = vshrl.u32 %v1191, 7
    %v1193 = vsub.s32 %v1130, %v1192
    %v1194 = vrot.slane %v1187, %v1193
    %v1195 = vlaneseq
    %v1196 = vshrl.u32 %v1195, 7
    %v1197 = vsub.s32 %v1130, %v1196
    %v1198 = vrot.slane %v1188, %v1197
    %1201 = vst.msk [vmem:[#allocation12 + $0x1] sm:$0x1] %vm1141, %v1194
    %1202 = vst.msk [vmem:[#allocation12 + $0x5] sm:$0x1] %vm1141, %v1198
    %v1203 = vld [vmem:[#allocation11] sm:$0xff]
    %v1204 = vld [vmem:[#allocation11 + $0x8] sm:$0xff]
    %v1205 = vmul.f32 %v1203, %v1109
    %v1206 = vmul.f32 %v1204, %v1113
    %v1207 = vsel %vm103, %v1205, 0.0
    %1208 = vadd.xlane.f32.xlu0 %v1207
    %v1209 = vpop.xlane.xlu0 %1208
    %v1210 = vsel %vm103, %v1206, 0.0
    %1211 = vadd.xlane.f32.xlu0 %v1210
    %v1212 = vpop.xlane.xlu0 %1211
    %v1213 = vadd.f32 %v1209, %v1124
    %v1214 = vadd.f32 %v1212, %v1124
    %v1217 = vlaneseq
    %v1218 = vshrl.u32 %v1217, 7
    %v1219 = vsub.s32 %v1130, %v1218
    %v1220 = vrot.slane %v1213, %v1219
    %v1221 = vlaneseq
    %v1222 = vshrl.u32 %v1221, 7
    %v1223 = vsub.s32 %v1130, %v1222
    %v1224 = vrot.slane %v1214, %v1223
    %1227 = vst.msk [vmem:[#allocation12 + $0x2] sm:$0x1] %vm1141, %v1220
    %1228 = vst.msk [vmem:[#allocation12 + $0x6] sm:$0x1] %vm1141, %v1224
    %v1229 = vld [vmem:[#allocation9] sm:$0xff]
    %v1230 = vld [vmem:[#allocation9 + $0x8] sm:$0xff]
    %v1231 = vmul.f32 %v1229, %v1172
    %v1232 = vmul.f32 %v1230, %v1176
    %v1233 = vsel %vm103, %v1231, 0.0
    %1234 = vadd.xlane.f32.xlu0 %v1233
    %v1235 = vpop.xlane.xlu0 %1234
    %v1236 = vsel %vm103, %v1232, 0.0
    %1237 = vadd.xlane.f32.xlu0 %v1236
    %v1238 = vpop.xlane.xlu0 %1237
    %v1239 = vadd.f32 %v1235, %v1124
    %v1240 = vadd.f32 %v1238, %v1124
    %v1243 = vlaneseq
    %v1244 = vshrl.u32 %v1243, 7
    %v1245 = vsub.s32 %v1130, %v1244
    %v1246 = vrot.slane %v1239, %v1245
    %v1247 = vlaneseq
    %v1248 = vshrl.u32 %v1247, 7
    %v1249 = vsub.s32 %v1130, %v1248
    %v1250 = vrot.slane %v1240, %v1249
    %1253 = vst.msk [vmem:[#allocation12 + $0x3] sm:$0x1] %vm1141, %v1246
    %1254 = vst.msk [vmem:[#allocation12 + $0x7] sm:$0x1] %vm1141, %v1250
    // Predicated region
    $region54: #{tpu_custom_call.1} parent=1 // pred_check
      _
    $region55: #{tpu_custom_call.1} parent=1 // pred_check_branch
      %1256 = sbr.rel (0) target = $region57
    $region56: #{tpu_custom_call.1} parent=1 // pred_region
      %s1258 = ssub.s32 128, 128
      %1259 = vsyncadd [#allocation5], %s1258
      %s1260 = sshll.u32 [#allocation12], 4
      %s1261 = int_to_ptr.vmem [resolvable:$true] %s1260
      %1266 = dma.vmem_to_hbm [thread:$0]  %s1261, 128, %s8, [#allocation5], 64, 64, 4
    $region57: #{tpu_custom_call.1} parent=1 // pred_fallthru
      _
    // Predicated region
    $region58: #{tpu_custom_call.1} parent=1 // pred_check
      _
    $region59: #{tpu_custom_call.1} parent=1 // pred_check_branch
      %1268 = sbr.rel (0) target = $region61
    $region60: #{tpu_custom_call.1} parent=1 // pred_region
      %1269 = dma.done [#allocation5], 128
    $region61: #{tpu_custom_call.1} parent=1 // pred_fallthru
      _
    %1270 = vsyncpa [#allocation4], 1
    %1271 = vsyncpa [#allocation7], 1
    %1272 = vsyncpa [#allocation10], 1
    %1273 = vsyncpa [#allocation5], 1

</llo_original>
